<compile_context>
chip_gen: v5e
topology: v5e:2x2
jax: 0.10.0
libtpu: 0.0.40
codegen_flags: <defaults>
</compile_context>

<pallas_src>
import jax
import jax.numpy as jnp
from jax.experimental import pallas as pl
from jax.experimental.pallas import tpu as pltpu

OUT_LANES = 128  # lane-dense output width (value broadcast across lanes)


def value_net_kernel(state_ref, action_ref, w1s_ref, w1a_ref, b1_ref,
                     w2_ref, b2_ref, w3_ref, b3_ref, out_ref):
    # state_ref:  [TB, obs_dim]      w1s_ref: [obs_dim, H]
    # action_ref: [TB, action_dim]   w1a_ref: [action_dim, H]
    # b1_ref/b2_ref: [1, H]          w2_ref: [H, H]
    # w3_ref: [1, H]                 b3_ref: [1, 1] (SMEM scalar)
    # out_ref: [TB, OUT_LANES]

    # Layer 1 -- fused concat as two MXU pushes accumulated in fp32.
    h1 = jnp.dot(state_ref[...], w1s_ref[...],
                 preferred_element_type=jnp.float32)
    h1 = h1 + jnp.dot(action_ref[...], w1a_ref[...],
                      preferred_element_type=jnp.float32)
    h1 = jnp.maximum(h1 + b1_ref[...], 0.0)

    # Layer 2 -- [TB, H] @ [H, H] on the MXU.
    h2 = jnp.dot(h1, w2_ref[...], preferred_element_type=jnp.float32)
    h2 = jnp.maximum(h2 + b2_ref[...], 0.0)

    # Layer 3 (out_features = 1) -- VPU multiply + XLU lane reduction; bias
    # added from the SMEM scalar.
    val = jnp.sum(h2 * w3_ref[...], axis=-1, keepdims=True) + b3_ref[0, 0]

    # Lane-dense store: broadcast the scalar value across 128 lanes.
    out_ref[...] = jnp.broadcast_to(val, out_ref.shape).astype(out_ref.dtype)


def value_network_forward(state, action, params, *, block_b=512):
    """state: [B, obs_dim], action: [B, action_dim] -> [B, 1] (fp32)."""
    state = state.astype(jnp.float32)
    action = action.astype(jnp.float32)
    B, obs_dim = state.shape
    _, action_dim = action.shape

    w1_s = params["w1_s"]          # [obs_dim, H]
    w1_a = params["w1_a"]          # [action_dim, H]
    b1 = params["b1"]              # [1, H]
    w2 = params["w2"]              # [H, H]
    b2 = params["b2"]              # [1, H]
    w3 = params["w3"]              # [1, H]
    b3 = params["b3"]              # [1, 1]
    hidden = w2.shape[0]

    # Batch tile: full batch if small, otherwise block_b-row tiles (multiple
    # of 8 sublanes). A partial trailing tile is handled by Pallas masking.
    tb = B if B <= block_b else block_b
    grid = (pl.cdiv(B, tb),)

    tiled = lambda shape: pl.BlockSpec(shape, lambda i: (i, 0))      # batch-tiled
    resident = lambda shape: pl.BlockSpec(shape, lambda i: (0, 0))   # VMEM-resident

    out = pl.pallas_call(
        value_net_kernel,
        out_shape=jax.ShapeDtypeStruct((B, OUT_LANES), jnp.float32),
        grid=grid,
        in_specs=[
            tiled((tb, obs_dim)),
            tiled((tb, action_dim)),
            resident((obs_dim, hidden)),
            resident((action_dim, hidden)),
            resident((1, hidden)),
            resident((hidden, hidden)),
            resident((1, hidden)),
            resident((1, hidden)),
            pl.BlockSpec(memory_space=pltpu.MemorySpace.SMEM),  # b3 scalar
        ],
        out_specs=tiled((tb, OUT_LANES)),
        compiler_params=pltpu.CompilerParams(
            dimension_semantics=("parallel",),
        ),
    )(state, action, w1_s, w1_a, b1, w2, b2, w3, b3)

    # Cheap wrapper slice back to the PyTorch output shape [B, 1].
    return out[:, :1]


def init_params(key, obs_dim, action_dim, hidden_dim, init_w=0.003):
    """Init mirroring the PyTorch module, stored in kernel-native layout:
    weights as [in, out] (linear1 pre-split into state/action halves),
    biases as [1, H] / [1, 1]. No per-call transposes needed."""
    d_in = obs_dim + action_dim
    k1, k2, k3, k4, k5, k6 = jax.random.split(key, 6)

    bound1 = 1.0 / (d_in ** 0.5)
    bound2 = 1.0 / (hidden_dim ** 0.5)

    w1 = jax.random.uniform(k1, (d_in, hidden_dim), jnp.float32,
                            -bound1, bound1)
    params = {
        "w1_s": w1[:obs_dim],                       # [obs_dim, H]
        "w1_a": w1[obs_dim:],                       # [action_dim, H]
        "b1": jax.random.uniform(k2, (1, hidden_dim), jnp.float32,
                                 -bound1, bound1),
        "w2": jax.random.uniform(k3, (hidden_dim, hidden_dim), jnp.float32,
                                 -bound2, bound2),  # [in, out]
        "b2": jax.random.uniform(k4, (1, hidden_dim), jnp.float32,
                                 -bound2, bound2),
        # linear3: uniform(-init_w, init_w) as in the module; stored as [1, H].
        "w3": jax.random.uniform(k5, (1, hidden_dim), jnp.float32,
                                 -init_w, init_w),
        "b3": jax.random.uniform(k6, (1, 1), jnp.float32, -init_w, init_w),
    }
    return params


if __name__ == "__main__":
    obs_dim, action_dim, hidden_dim = 3, 1, 32
    batch = 8

    key = jax.random.PRNGKey(0)
    kp, ks, ka = jax.random.split(key, 3)

    params = init_params(kp, obs_dim, action_dim, hidden_dim)
    state = jax.random.normal(ks, (batch, obs_dim), jnp.float32)
    action = jax.random.normal(ka, (batch, action_dim), jnp.float32)

    out = value_network_forward(state, action, params)
    out = jax.block_until_ready(out)

    # Pure-JAX reference (same math, no Pallas).
    x = jnp.concatenate([state, action], axis=1)
    w1_full = jnp.concatenate([params["w1_s"], params["w1_a"]], axis=0)
    h1 = jax.nn.relu(x @ w1_full + params["b1"])
    h2 = jax.nn.relu(h1 @ params["w2"] + params["b2"])
    ref = h2 @ params["w3"].T + params["b3"]

    assert out.shape == (batch, 1)
    assert jnp.allclose(out, ref, atol=1e-4, rtol=1e-4)

    print("KERNEL_OK")
</pallas_src>

<mosaic_0001>
module attributes {stable_mosaic.version = 11 : i64} {
  func.func @value_net_kernel(%arg0: i32, %arg1: memref<8x3xf32, #tpu.memory_space<vmem>>, %arg2: memref<8x1xf32, #tpu.memory_space<vmem>>, %arg3: memref<3x32xf32, #tpu.memory_space<vmem>>, %arg4: memref<1x32xf32, #tpu.memory_space<vmem>>, %arg5: memref<1x32xf32, #tpu.memory_space<vmem>>, %arg6: memref<32x32xf32, #tpu.memory_space<vmem>>, %arg7: memref<1x32xf32, #tpu.memory_space<vmem>>, %arg8: memref<1x32xf32, #tpu.memory_space<vmem>>, %arg9: memref<1x1xf32, #tpu.memory_space<smem>>, %arg10: memref<8x128xf32, #tpu.memory_space<vmem>>) attributes {dimension_semantics = [#tpu.dimension_semantics<parallel>], iteration_bounds = array<i64: 1>, scalar_prefetch = 0 : i64, scratch_operands = 0 : i64, tpu.core_type = #tpu.core_type<tc>, window_params = [{transform_indices = @transform_0, window_bounds = array<i64: 8, 3>}, {transform_indices = @transform_1, window_bounds = array<i64: 8, 1>}, {pipeline_mode = #tpu.pipeline_mode<synchronous>, transform_indices = @transform_2, window_bounds = array<i64: 3, 32>}, {pipeline_mode = #tpu.pipeline_mode<synchronous>, transform_indices = @transform_3, window_bounds = array<i64: 1, 32>}, {pipeline_mode = #tpu.pipeline_mode<synchronous>, transform_indices = @transform_4, window_bounds = array<i64: 1, 32>}, {pipeline_mode = #tpu.pipeline_mode<synchronous>, transform_indices = @transform_5, window_bounds = array<i64: 32, 32>}, {pipeline_mode = #tpu.pipeline_mode<synchronous>, transform_indices = @transform_6, window_bounds = array<i64: 1, 32>}, {pipeline_mode = #tpu.pipeline_mode<synchronous>, transform_indices = @transform_7, window_bounds = array<i64: 1, 32>}, {transform_indices = @transform_8, window_bounds = array<i64: 1, 1>}, {transform_indices = @transform_9, window_bounds = array<i64: 8, 128>}]} {
    %c0 = arith.constant 0 : index
    %c0_0 = arith.constant 0 : index
    %0 = vector.load %arg1[%c0, %c0_0] : memref<8x3xf32, #tpu.memory_space<vmem>>, vector<8x3xf32>
    %c0_1 = arith.constant 0 : index
    %c0_2 = arith.constant 0 : index
    %1 = vector.load %arg3[%c0_1, %c0_2] : memref<3x32xf32, #tpu.memory_space<vmem>>, vector<3x32xf32>
    %cst = arith.constant dense<0.000000e+00> : vector<8x32xf32>
    %2 = tpu.matmul %0, %1, %cst {dimension_numbers = #tpu.dot_dimension_numbers<[1], [0], [0], [1], [0, 0, 1, 1], [], []>} : vector<8x3xf32>, vector<3x32xf32>, vector<8x32xf32> -> vector<8x32xf32>
    %c0_3 = arith.constant 0 : index
    %c0_4 = arith.constant 0 : index
    %3 = vector.load %arg2[%c0_3, %c0_4] : memref<8x1xf32, #tpu.memory_space<vmem>>, vector<8x1xf32>
    %c0_5 = arith.constant 0 : index
    %c0_6 = arith.constant 0 : index
    %4 = vector.load %arg4[%c0_5, %c0_6] : memref<1x32xf32, #tpu.memory_space<vmem>>, vector<1x32xf32>
    %cst_7 = arith.constant dense<0.000000e+00> : vector<8x32xf32>
    %5 = tpu.matmul %3, %4, %cst_7 {dimension_numbers = #tpu.dot_dimension_numbers<[1], [0], [0], [1], [0, 0, 1, 1], [], []>} : vector<8x1xf32>, vector<1x32xf32>, vector<8x32xf32> -> vector<8x32xf32>
    %6 = arith.addf %2, %5 : vector<8x32xf32>
    %c0_8 = arith.constant 0 : index
    %c0_9 = arith.constant 0 : index
    %7 = vector.load %arg5[%c0_8, %c0_9] : memref<1x32xf32, #tpu.memory_space<vmem>>, vector<1x32xf32>
    %8 = vector.broadcast %7 : vector<1x32xf32> to vector<8x32xf32>
    %9 = arith.addf %6, %8 : vector<8x32xf32>
    %cst_10 = arith.constant 0.000000e+00 : f32
    %10 = vector.broadcast %cst_10 : f32 to vector<8x32xf32>
    %11 = arith.maximumf %9, %10 : vector<8x32xf32>
    %c0_11 = arith.constant 0 : index
    %c0_12 = arith.constant 0 : index
    %12 = vector.load %arg6[%c0_11, %c0_12] : memref<32x32xf32, #tpu.memory_space<vmem>>, vector<32x32xf32>
    %cst_13 = arith.constant dense<0.000000e+00> : vector<8x32xf32>
    %13 = tpu.matmul %11, %12, %cst_13 {dimension_numbers = #tpu.dot_dimension_numbers<[1], [0], [0], [1], [0, 0, 1, 1], [], []>} : vector<8x32xf32>, vector<32x32xf32>, vector<8x32xf32> -> vector<8x32xf32>
    %c0_14 = arith.constant 0 : index
    %c0_15 = arith.constant 0 : index
    %14 = vector.load %arg7[%c0_14, %c0_15] : memref<1x32xf32, #tpu.memory_space<vmem>>, vector<1x32xf32>
    %15 = vector.broadcast %14 : vector<1x32xf32> to vector<8x32xf32>
    %16 = arith.addf %13, %15 : vector<8x32xf32>
    %cst_16 = arith.constant 0.000000e+00 : f32
    %17 = vector.broadcast %cst_16 : f32 to vector<8x32xf32>
    %18 = arith.maximumf %16, %17 : vector<8x32xf32>
    %c0_17 = arith.constant 0 : index
    %c0_18 = arith.constant 0 : index
    %19 = vector.load %arg8[%c0_17, %c0_18] : memref<1x32xf32, #tpu.memory_space<vmem>>, vector<1x32xf32>
    %20 = vector.broadcast %19 : vector<1x32xf32> to vector<8x32xf32>
    %21 = arith.mulf %18, %20 : vector<8x32xf32>
    %cst_19 = arith.constant dense<0.000000e+00> : vector<8xf32>
    %22 = vector.multi_reduction <add>, %21, %cst_19 [1] : vector<8x32xf32> to vector<8xf32>
    %23 = vector.shape_cast %22 : vector<8xf32> to vector<8x1xf32>
    %c0_20 = arith.constant 0 : index
    %c0_21 = arith.constant 0 : index
    %24 = memref.load %arg9[%c0_20, %c0_21] : memref<1x1xf32, #tpu.memory_space<smem>>
    %25 = vector.broadcast %24 : f32 to vector<8x1xf32>
    %26 = arith.addf %23, %25 : vector<8x1xf32>
    %27 = vector.shape_cast %26 : vector<8x1xf32> to vector<8x1xf32>
    %28 = vector.broadcast %27 : vector<8x1xf32> to vector<8x128xf32>
    %c0_22 = arith.constant 0 : index
    %c0_23 = arith.constant 0 : index
    %29 = vector.load %arg10[%c0_22, %c0_23] : memref<8x128xf32, #tpu.memory_space<vmem>>, vector<8x128xf32>
    tpu.vector_store %arg10[%c0_22, %c0_23], %28 {strides = array<i32>} : memref<8x128xf32, #tpu.memory_space<vmem>>, vector<8x128xf32>,
    return
  }
  func.func @transform_0(%arg0: i32) -> (i32, i32) {
    %c0_i32 = arith.constant 0 : i32
    %c0_i32_0 = arith.constant 0 : i32
    return %arg0, %c0_i32 : i32, i32
  }
  func.func @transform_1(%arg0: i32) -> (i32, i32) {
    %c0_i32 = arith.constant 0 : i32
    %c0_i32_0 = arith.constant 0 : i32
    return %arg0, %c0_i32 : i32, i32
  }
  func.func @transform_2(%arg0: i32) -> (i32, i32) {
    %c0_i32 = arith.constant 0 : i32
    %c0_i32_0 = arith.constant 0 : i32
    %c0_i32_1 = arith.constant 0 : i32
    return %c0_i32, %c0_i32_0 : i32, i32
  }
  func.func @transform_3(%arg0: i32) -> (i32, i32) {
    %c0_i32 = arith.constant 0 : i32
    %c0_i32_0 = arith.constant 0 : i32
    %c0_i32_1 = arith.constant 0 : i32
    return %c0_i32, %c0_i32_0 : i32, i32
  }
  func.func @transform_4(%arg0: i32) -> (i32, i32) {
    %c0_i32 = arith.constant 0 : i32
    %c0_i32_0 = arith.constant 0 : i32
    %c0_i32_1 = arith.constant 0 : i32
    return %c0_i32, %c0_i32_0 : i32, i32
  }
  func.func @transform_5(%arg0: i32) -> (i32, i32) {
    %c0_i32 = arith.constant 0 : i32
    %c0_i32_0 = arith.constant 0 : i32
    %c0_i32_1 = arith.constant 0 : i32
    return %c0_i32, %c0_i32_0 : i32, i32
  }
  func.func @transform_6(%arg0: i32) -> (i32, i32) {
    %c0_i32 = arith.constant 0 : i32
    %c0_i32_0 = arith.constant 0 : i32
    %c0_i32_1 = arith.constant 0 : i32
    return %c0_i32, %c0_i32_0 : i32, i32
  }
  func.func @transform_7(%arg0: i32) -> (i32, i32) {
    %c0_i32 = arith.constant 0 : i32
    %c0_i32_0 = arith.constant 0 : i32
    %c0_i32_1 = arith.constant 0 : i32
    return %c0_i32, %c0_i32_0 : i32, i32
  }
  func.func @transform_8(%arg0: i32) -> (i32, i32) {
    %c0_i32 = arith.constant 0 : i32
    %c0_i32_0 = arith.constant 0 : i32
    %c0_i32_1 = arith.constant 0 : i32
    return %c0_i32, %c0_i32_0 : i32, i32
  }
  func.func @transform_9(%arg0: i32) -> (i32, i32) {
    %c0_i32 = arith.constant 0 : i32
    %c0_i32_0 = arith.constant 0 : i32
    return %arg0, %c0_i32 : i32, i32
  }
}

</mosaic_0001>

<llo_original>
// kernel: tpu_custom_call.1
$region0: #{tpu_custom_call.1}
  #allocation0 [shape = 'u32[]', space=smem, size = 0x4, offset = 0x4, fixed_abs, tag = 'smem constant byte address 0x4 - core index']
  #allocation1 [shape = 'u32[72,128]{1,0:T(1,128)}', space=vmem, size = 0x9000, scoped, tag = 'internal scratch']
  #allocation2 [shape = 'f32[1,1]{1,0:T(1,128)S(6)}', space=smem, size = 0x200, scoped, tag = 'scoped memory for tpu_custom_call.1']
  %s0 = inlined_call_operand.vmem [shape: f32[8,3], index: 0, kind: input, shape index: {}]
  %s1 = inlined_call_operand.vmem [shape: f32[8,1], index: 1, kind: input, shape index: {}]
  %s2 = inlined_call_operand.vmem [shape: f32[3,32], index: 2, kind: input, shape index: {}]
  %s3 = inlined_call_operand.vmem [shape: f32[1,32], index: 3, kind: input, shape index: {}]
  %s4 = inlined_call_operand.vmem [shape: f32[1,32], index: 4, kind: input, shape index: {}]
  %s5 = inlined_call_operand.hbm [shape: f32[32,32], index: 5, kind: input, shape index: {}]
  %s6 = inlined_call_operand.vmem [shape: f32[1,32], index: 6, kind: input, shape index: {}]
  %s7 = inlined_call_operand.vmem [shape: f32[1,32], index: 7, kind: input, shape index: {}]
  %s8 = inlined_call_operand.<no memory space> [shape: f32[1,1], index: 8, kind: input, shape index: {}]
  %s9 = inlined_call_operand.hbm [shape: f32[8,128], index: 9, kind: output, shape index: {}]
  %s10 = sld [smem:[#allocation0]]
  $region50: #{tpu_custom_call.1} parent=0
    _
  %s12 = ssub.s32 1, %s10
  %s13 = scalar_select 0, %s12, %s10
  %14 = sst [smem:[#allocation2]] %s8
  $region1: #{tpu_custom_call.1} parent=0
    #allocation3 [shape = 'u8[16384]{0}', space=vmem, size = 0x4000, scoped, tag = 'input window, operand 5, single buffered']
    #allocation4 [shape = 's32[1]{0}', space=sflag, size = 0x4, scoped, tag = 'scoped memory for tpu_custom_call.1']
    #allocation5 [shape = 's32[1]{0}', space=sflag, size = 0x4, scoped, tag = 'scoped memory for tpu_custom_call.1']
    #allocation6 [shape = 'u8[4096]{0}', space=vmem, size = 0x1000, scoped, tag = 'output window, operand 0, single buffered']
    %15 = vsyncpa [#allocation4], 0
    %16 = vsyncpa [#allocation5], 0
    // Predicated region
    $region2: #{tpu_custom_call.1} parent=1 // pred_check
      _
    $region3: #{tpu_custom_call.1} parent=1 // pred_check_branch
      %18 = sbr.rel (0) target = $region5
    $region4: #{tpu_custom_call.1} parent=1 // pred_region
      _
    $region5: #{tpu_custom_call.1} parent=1 // pred_fallthru
      _
    // Predicated region
    $region6: #{tpu_custom_call.1} parent=1 // pred_check
      _
    $region7: #{tpu_custom_call.1} parent=1 // pred_check_branch
      %20 = sbr.rel (0) target = $region9
    $region8: #{tpu_custom_call.1} parent=1 // pred_region
      _
    $region9: #{tpu_custom_call.1} parent=1 // pred_fallthru
      _
    // Predicated region
    $region10: #{tpu_custom_call.1} parent=1 // pred_check
      _
    $region11: #{tpu_custom_call.1} parent=1 // pred_check_branch
      %22 = sbr.rel (0) target = $region13
    $region12: #{tpu_custom_call.1} parent=1 // pred_region
      _
    $region13: #{tpu_custom_call.1} parent=1 // pred_fallthru
      _
    // Predicated region
    $region14: #{tpu_custom_call.1} parent=1 // pred_check
      _
    $region15: #{tpu_custom_call.1} parent=1 // pred_check_branch
      %24 = sbr.rel (0) target = $region17
    $region16: #{tpu_custom_call.1} parent=1 // pred_region
      _
    $region17: #{tpu_custom_call.1} parent=1 // pred_fallthru
      _
    // Predicated region
    $region18: #{tpu_custom_call.1} parent=1 // pred_check
      _
    $region19: #{tpu_custom_call.1} parent=1 // pred_check_branch
      %26 = sbr.rel (0) target = $region21
    $region20: #{tpu_custom_call.1} parent=1 // pred_region
      _
    $region21: #{tpu_custom_call.1} parent=1 // pred_fallthru
      _
    // Predicated region
    $region22: #{tpu_custom_call.1} parent=1 // pred_check
      _
    $region23: #{tpu_custom_call.1} parent=1 // pred_check_branch
      %28 = sbr.rel (0) target = $region25
    $region24: #{tpu_custom_call.1} parent=1 // pred_region
      %30 = vsyncadd [#allocation4], 0
      %s31 = sshll.u32 %s5, 4
      %s32 = int_to_ptr.hbm [resolvable:$true] %s31
      %s33 = sshll.u32 [#allocation3], 4
      %s34 = int_to_ptr.vmem [resolvable:$true] %s33
      %39 = dma.hbm_to_vmem [thread:$0]  %s32, 512, %s34, [#allocation4], 128, 128, 8
    $region25: #{tpu_custom_call.1} parent=1 // pred_fallthru
      _
    // Predicated region
    $region26: #{tpu_custom_call.1} parent=1 // pred_check
      _
    $region27: #{tpu_custom_call.1} parent=1 // pred_check_branch
      %41 = sbr.rel (0) target = $region29
    $region28: #{tpu_custom_call.1} parent=1 // pred_region
      _
    $region29: #{tpu_custom_call.1} parent=1 // pred_fallthru
      _
    // Predicated region
    $region30: #{tpu_custom_call.1} parent=1 // pred_check
      _
    $region31: #{tpu_custom_call.1} parent=1 // pred_check_branch
      %43 = sbr.rel (0) target = $region33
    $region32: #{tpu_custom_call.1} parent=1 // pred_region
      _
    $region33: #{tpu_custom_call.1} parent=1 // pred_fallthru
      _
    // Predicated region
    $region34: #{tpu_custom_call.1} parent=1 // pred_check
      _
    $region35: #{tpu_custom_call.1} parent=1 // pred_check_branch
      %45 = sbr.rel (0) target = $region37
    $region36: #{tpu_custom_call.1} parent=1 // pred_region
      _
    $region37: #{tpu_custom_call.1} parent=1 // pred_fallthru
      _
    // Predicated region
    $region38: #{tpu_custom_call.1} parent=1 // pred_check
      _
    $region39: #{tpu_custom_call.1} parent=1 // pred_check_branch
      %47 = sbr.rel (0) target = $region41
    $region40: #{tpu_custom_call.1} parent=1 // pred_region
      %49 = dma.done [#allocation4], 512
    $region41: #{tpu_custom_call.1} parent=1 // pred_fallthru
      _
    %v50 = vld [vmem:[%s0] sm:$0xff]
    %v51 = vld [vmem:[%s2] sm:$0x7]
    %v52 = vld [vmem:[%s1] sm:$0xff]
    %v53 = vld [vmem:[%s3] sm:$0x1]
    %vm54 = vcmask 7168
    %v56 = vsel %vm54, %v52, 0
    %vm58 = vcmask 1040384
    %v60 = vsel %vm58, %v53, 0
    %62 = vmatpush.msra.mxu0 0.0
    %63 = vmatpush.msra.mxu0 0.0
    %64 = vmatpush.msra.mxu0 0.0
    %65 = vmatpush.msra.mxu0 0.0
    %66 = vmatpush.msra.mxu0 0.0
    %67 = vmatpush.msra.mxu0 0.0
    %68 = vmatpush.msra.mxu0 0.0
    %69 = vmatpush.msra.mxu0 0.0
    %70 = vmatpush.msra.mxu0 0.0
    %71 = vmatpush.msra.mxu0 0.0
    %72 = vmatpush.msra.mxu0 0.0
    %73 = vmatpush.msra.mxu0 0.0
    %74 = vmatpush.msra.mxu0 0.0
    %75 = vmatpush.msra.mxu0 0.0
    %76 = vmatpush.msra.mxu0 0.0
    %77 = vmatpush.msra.mxu0 %v60
    %78 = vmatmul.f32.gmra.mxu0 %v56
    %v79 = vpop.f32.mrf.mxu0
    %v80 = vadd.f32 0.0, %v79
    %81 = vdwg.mxu0
    %vm82 = vcmask 23552
    %v84 = vsel %vm82, %v50, 0
    %vm86 = vcmask 1042432
    %v88 = vsel %vm86, %v51, 0
    %90 = vmatpush.msra.mxu0 0.0
    %91 = vmatpush.msra.mxu0 0.0
    %92 = vmatpush.msra.mxu0 0.0
    %93 = vmatpush.msra.mxu0 0.0
    %94 = vmatpush.msra.mxu0 0.0
    %95 = vmatpush.msra.mxu0 0.0
    %96 = vmatpush.msra.mxu0 0.0
    %97 = vmatpush.msra.mxu0 0.0
    %98 = vmatpush.msra.mxu0 0.0
    %99 = vmatpush.msra.mxu0 0.0
    %100 = vmatpush.msra.mxu0 0.0
    %101 = vmatpush.msra.mxu0 0.0
    %102 = vmatpush.msra.mxu0 0.0
    %103 = vmatpush.msra.mxu0 0.0
    %104 = vmatpush.msra.mxu0 0.0
    %105 = vmatpush.msra.mxu0 %v88
    %106 = vmatmul.f32.gmra.mxu0 %v84
    %v107 = vpop.f32.mrf.mxu0
    %v108 = vadd.f32 %v80, %v107
    %109 = vdwg.mxu0
    %v110 = vld [vmem:[%s4] sm:$0x1]
    %v112 = vperm.slane %v110, 0
    %v114 = vadd.f32 %v108, %v112
    %v115 = vmax.f32 %v114, 0.0
    %v116 = vld [vmem:[#allocation3] sm:$0xff]
    %v117 = vld [vmem:[#allocation3 + $0x8] sm:$0xff]
    %v118 = vld [vmem:[#allocation3 + $0x10] sm:$0xff]
    %v119 = vld [vmem:[#allocation3 + $0x18] sm:$0xff]
    %v120 = vld [vmem:[%s6] sm:$0x1]
    %v122 = vperm.slane %v120, 0
    %vm124 = vcmask 261120
    %v126 = vsel %vm124, %v115, 0
    %128 = vmatpush.msra.mxu0 0.0
    %129 = vmatpush.msra.mxu0 0.0
    %130 = vmatpush.msra.mxu0 0.0
    %131 = vmatpush.msra.mxu0 0.0
    %132 = vmatpush.msra.mxu0 0.0
    %133 = vmatpush.msra.mxu0 0.0
    %134 = vmatpush.msra.mxu0 0.0
    %135 = vmatpush.msra.mxu0 0.0
    %136 = vmatpush.msra.mxu0 0.0
    %137 = vmatpush.msra.mxu0 0.0
    %138 = vmatpush.msra.mxu0 0.0
    %139 = vmatpush.msra.mxu0 0.0
    %140 = vmatpush.msra.mxu0 %v119
    %141 = vmatpush.msra.mxu0 %v118
    %142 = vmatpush.msra.mxu0 %v117
    %143 = vmatpush.msra.mxu0 %v116
    %144 = vmatmul.f32.gmra.mxu0 %v126
    %v145 = vpop.f32.mrf.mxu0
    %v146 = vadd.f32 %v122, %v145
    %147 = vdwg.mxu0
    %v148 = vmax.f32 %v146, 0.0
    %v149 = vld [vmem:[%s7] sm:$0x1]
    %v151 = vperm.slane %v149, 0
    %v153 = vmul.f32 %v148, %v151
    %v154 = vsel %vm124, %v153, 0.0
    %155 = vadd.xlane.f32.xlu0 %v154
    %v156 = vpop.xlane.xlu0 %155
    %s157 = sld [smem:[#allocation2]]
    %v158 = vstv %s157
    %v159 = vadd.f32 %v156, %v158
    %160 = vst [vmem:[#allocation6] sm:$0xff] %v159
    // Predicated region
    $region42: #{tpu_custom_call.1} parent=1 // pred_check
      _
    $region43: #{tpu_custom_call.1} parent=1 // pred_check_branch
      %162 = sbr.rel (0) target = $region45
    $region44: #{tpu_custom_call.1} parent=1 // pred_region
      %164 = vsyncadd [#allocation5], 0
      %s166 = sshll.u32 [#allocation6], 4
      %s167 = int_to_ptr.vmem [resolvable:$true] %s166
      %s168 = sshll.u32 %s9, 4
      %s169 = int_to_ptr.hbm [resolvable:$true] %s168
      %171 = dma.vmem_to_hbm [thread:$0]  %s167, 128, %s169, [#allocation5]
    $region45: #{tpu_custom_call.1} parent=1 // pred_fallthru
      _
    // Predicated region
    $region46: #{tpu_custom_call.1} parent=1 // pred_check
      _
    $region47: #{tpu_custom_call.1} parent=1 // pred_check_branch
      %173 = sbr.rel (0) target = $region49
    $region48: #{tpu_custom_call.1} parent=1 // pred_region
      %175 = dma.done [#allocation5], 128
    $region49: #{tpu_custom_call.1} parent=1 // pred_fallthru
      _
    %176 = vsyncpa [#allocation4], 1
    %177 = vsyncpa [#allocation5], 1

</llo_original>
